<compile_context>
chip_gen: v5e
topology: v5e:2x2
jax: 0.10.0
libtpu: 0.0.40
codegen_flags: <defaults>
</compile_context>

<pallas_src>
import functools

import numpy as np
import jax
import jax.numpy as jnp
from jax import lax
from jax.experimental import pallas as pl
from jax.experimental.pallas import tpu as pltpu


_VMEM_BUDGET_BYTES = 32 * 1024 * 1024   # conservative per-grid-step working-set target
_VMEM_LIMIT_BYTES = 48 * 1024 * 1024    # scoped VMEM requested from Mosaic (< v7x's 64 MiB)


def _round_up(x, m):
    return -(-x // m) * m


def _fused_softmax_nll_kernel(logits_ref, tgt_ref, p_true_ref, nll_ref, *,
                              ignore_index, hw, t_hw):
    """One pass over a logits tile, native NCHW layout.

    Blocks: logits (1, C, T) -> classes on sublanes, pixels on lanes;
            tgt / outputs (1, 1, T) -> lane-dense.
    Emits per pixel:
      nll    = logsumexp(logits) - logits[tgt]     (cross-entropy term)
      p_true = exp(-nll) = softmax(logits)[tgt]    (OHEM selection signal; 1.0 if ignored)
    The last pixel tile may be partial: its out-of-bounds lanes hold garbage in VMEM, so
    they are masked with a lane-index test (p_true forced to 1.0, nll forced to 0.0 so that
    Inf/NaN can never leak through the masked sum in the wrapper).
    """
    j = pl.program_id(1)
    logits = logits_ref[...].astype(jnp.float32)                      # (1, C, T)
    tgt = tgt_ref[...]                                                # (1, 1, T) i32

    lane = lax.broadcasted_iota(jnp.int32, tgt.shape, 2)              # (1, 1, T)
    in_bounds = (j * t_hw + lane) < hw                                # partial-tile mask
    valid = jnp.logical_and(tgt != ignore_index, in_bounds)
    tgt_c = jnp.where(valid, tgt, 0)                                  # clamp ignored/garbage

    # logsumexp over classes (sublane reduces -> XLU; exp/log -> EUP; hidden under DMA).
    m = jnp.max(logits, axis=1, keepdims=True)                        # (1, 1, T)
    denom = jnp.sum(jnp.exp(logits - m), axis=1, keepdims=True)       # (1, 1, T)
    lse = jnp.log(denom) + m

    onehot = lax.broadcasted_iota(jnp.int32, logits.shape, 1) == tgt_c   # (1, C, T)
    logit_true = jnp.sum(jnp.where(onehot, logits, 0.0), axis=1, keepdims=True)

    nll = lse - logit_true
    # softmax(logits)[tgt] up to ~1 ULP; saves a (C,T) where + sublane reduce + divide.
    p_true = jnp.exp(-nll)

    p_true_ref[...] = jnp.where(valid, p_true, 1.0)
    nll_ref[...] = jnp.where(in_bounds, nll, 0.0)


def _choose_hw_tile(hw, c, in_itemsize, n_batch):
    """Largest lane-aligned (multiple-of-128) pixel tile whose per-grid-step VMEM footprint
    stays under _VMEM_BUDGET_BYTES, then shrunk (if possible) so the grid has >= 4 steps
    for v7x's two TensorCores.  Per-pixel byte estimate:
      2*C*itemsize : double-buffered logits input block
      20*C         : ~4-5 live (C, T) f32/i32 temporaries inside the kernel body
      72           : tgt block (2x i32) + two f32 outputs (2x each) + (1, T) f32 temps
    """
    per_pixel = 2 * c * in_itemsize + 20 * c + 72
    t = max(128, _VMEM_BUDGET_BYTES // per_pixel)
    t = min(t, _round_up(hw, 128))
    t = (t // 128) * 128
    min_tiles = -(-4 // max(1, n_batch))                 # ceil(4 / N)
    if -(-hw // t) < min_tiles:
        t = max(128, min(t, _round_up(-(-hw // min_tiles), 128)))
    return t


def _kth_smallest_exact(x, k):
    """Exact k-th smallest of a non-negative f32 vector.

    Binary search over the IEEE-754 bit pattern (monotone for x >= 0): 32 rounds of a
    masked count over x.  Replaces lax.top_k(-x, k~1e5), which is a huge sorting-network
    op that dominated end-to-end wall clock.
    """
    bits = lax.bitcast_convert_type(x, jnp.int32)

    def body(_, state):
        lo, hi = state            # invariant: count(bits <= lo) < k <= count(bits <= hi)
        mid = lo + (hi - lo) // 2
        cnt = jnp.sum((bits <= mid).astype(jnp.int32))
        take_hi = cnt >= k
        return jnp.where(take_hi, lo, mid), jnp.where(take_hi, mid, hi)

    lo0 = jnp.int32(-1)              # count(<= -1) == 0 < k
    hi0 = jnp.int32(0x7F000000)      # huge finite float: count(<= hi0) == len(x) >= k
    _, hi = lax.fori_loop(0, 32, body, (lo0, hi0))
    return lax.bitcast_convert_type(hi, jnp.float32)


class OhemCrossEntropy2dPallas:
    def __init__(self, ignore_index=-1, thresh=0.7, min_kept=100000, use_weight=False):
        self.ignore_index = int(ignore_index)
        self.thresh = float(thresh)
        self.min_kept = int(min_kept)
        # TODO(synk): use_weight=True (per-class CE weights [1,2614,132,1126,57,16]) is not
        # wired into the kernel; only the default unweighted criterion is implemented.
        assert not use_weight, "use_weight=True not implemented"

    def __call__(self, pred, target):
        n, c, h, w = pred.shape
        hw = h * w
        p_total = n * hw

        # Native layout: (N, C, H, W) -> (N, C, H*W) is a free reshape.  No HBM transpose,
        # no jnp.pad: partial pixel tiles are masked inside the kernel.
        logits3 = pred.reshape(n, c, hw)                       # keep dtype; upcast in-kernel
        tgt3 = target.reshape(n, 1, hw).astype(jnp.int32)

        t_hw = _choose_hw_tile(hw, c, logits3.dtype.itemsize, n)
        grid = (n, -(-hw // t_hw))

        kernel = functools.partial(_fused_softmax_nll_kernel,
                                   ignore_index=self.ignore_index, hw=hw, t_hw=t_hw)

        # ---- fused kernel: one pass over the logits ---------------------------------
        p_true, nll = pl.pallas_call(
            kernel,
            out_shape=(jax.ShapeDtypeStruct((n, 1, hw), jnp.float32),
                       jax.ShapeDtypeStruct((n, 1, hw), jnp.float32)),
            grid=grid,
            in_specs=[pl.BlockSpec((1, c, t_hw), lambda i, j: (i, 0, j)),
                      pl.BlockSpec((1, 1, t_hw), lambda i, j: (i, 0, j))],
            out_specs=(pl.BlockSpec((1, 1, t_hw), lambda i, j: (i, 0, j)),
                       pl.BlockSpec((1, 1, t_hw), lambda i, j: (i, 0, j))),
            compiler_params=pltpu.CompilerParams(
                dimension_semantics=("parallel", "parallel"),
                vmem_limit_bytes=_VMEM_LIMIT_BYTES),
        )(logits3, tgt3)

        mask_prob = p_true.reshape(-1)                         # (N*H*W,)
        nll_flat = nll.reshape(-1)
        valid_flat = tgt3.reshape(-1) != self.ignore_index
        num_valid = jnp.sum(valid_flat.astype(jnp.int32))

        # ---- OHEM threshold (glue): exact k-th smallest, no lax.top_k ---------------
        threshold = jnp.float32(self.thresh)
        if self.min_kept > 0:
            k = min(p_total, self.min_kept)
            kth = _kth_smallest_exact(mask_prob, k)            # ignored pixels sit at 1.0
            threshold = jnp.where(kth > self.thresh, kth, threshold)
        kept = mask_prob <= threshold
        # torch prunes in its `elif num_valid > 0:` branch, which runs exactly when
        # (num_valid >= min_kept) and (num_valid > 0) -- including num_valid == min_kept.
        # do_ohem reproduces that branch condition verbatim.
        do_ohem = jnp.logical_and(num_valid >= self.min_kept, num_valid > 0)
        kept = jnp.where(do_ohem, kept, True)
        final_valid = jnp.logical_and(valid_flat, kept).astype(jnp.float32)

        cnt = jnp.sum(final_valid)
        # NOTE: cnt == 0 (no valid pixels) yields NaN, matching torch's empty mean.
        return jnp.sum(nll_flat * final_valid) / cnt


def reference_loss(pred, target, ignore_index=-1, thresh=0.7, min_kept=100):
    """Pure-JAX replica of the torch forward (verification only)."""
    n, c, h, w = pred.shape
    p = n * h * w
    logits = jnp.transpose(pred, (0, 2, 3, 1)).reshape(p, c).astype(jnp.float32)
    tgt = target.reshape(p).astype(jnp.int32)
    valid = tgt != ignore_index
    tgtc = jnp.where(valid, tgt, 0)
    num_valid = jnp.sum(valid.astype(jnp.int32))
    prob = jax.nn.softmax(logits, axis=1)
    p_true = jnp.take_along_axis(prob, tgtc[:, None], axis=1)[:, 0]
    p_true = jnp.where(valid, p_true, 1.0)
    threshold = jnp.float32(thresh)
    if min_kept > 0:
        kth = jnp.sort(p_true)[min(p, min_kept) - 1]
        threshold = jnp.where(kth > thresh, kth, threshold)
    kept = p_true <= threshold
    do_ohem = jnp.logical_and(num_valid >= min_kept, num_valid > 0)
    kept = jnp.where(do_ohem, kept, True)
    fv = jnp.logical_and(valid, kept).astype(jnp.float32)
    logp = jax.nn.log_softmax(logits, axis=1)
    nll = -jnp.take_along_axis(logp, tgtc[:, None], axis=1)[:, 0]
    return jnp.sum(nll * fv) / jnp.sum(fv)


if __name__ == "__main__":
    key = jax.random.PRNGKey(0)
    k1, k2 = jax.random.split(key)
    N, C, H, W = 2, 4, 16, 16
    pred = jax.random.normal(k1, (N, C, H, W), dtype=jnp.float32) * 3.0
    # labels in [-1, C): -1 is the ignore_index
    target = jax.random.randint(k2, (N, H, W), -1, C, dtype=jnp.int32)

    loss_fn = OhemCrossEntropy2dPallas(ignore_index=-1, thresh=0.7, min_kept=100)
    loss = loss_fn(pred, target)
    loss = jax.block_until_ready(loss)

    ref = reference_loss(pred, target, ignore_index=-1, thresh=0.7, min_kept=100)
    assert np.isfinite(float(loss)), "loss is not finite"
    np.testing.assert_allclose(float(loss), float(ref), rtol=1e-5, atol=1e-5)
    print("KERNEL_OK")
</pallas_src>

<mosaic_0001>
module attributes {stable_mosaic.version = 11 : i64} {
  func.func @_fused_softmax_nll_kernel(%arg0: i32, %arg1: i32, %arg2: memref<1x4x128xf32, #tpu.memory_space<vmem>>, %arg3: memref<1x1x128xi32, #tpu.memory_space<vmem>>, %arg4: memref<1x1x128xf32, #tpu.memory_space<vmem>>, %arg5: memref<1x1x128xf32, #tpu.memory_space<vmem>>) attributes {dimension_semantics = [#tpu.dimension_semantics<parallel>, #tpu.dimension_semantics<parallel>], iteration_bounds = array<i64: 2, 2>, scalar_prefetch = 0 : i64, scratch_operands = 0 : i64, tpu.core_type = #tpu.core_type<tc>, window_params = [{transform_indices = @transform_0, window_bounds = array<i64: 1, 4, 128>}, {transform_indices = @transform_1, window_bounds = array<i64: 1, 1, 128>}, {transform_indices = @transform_2, window_bounds = array<i64: 1, 1, 128>}, {transform_indices = @transform_3, window_bounds = array<i64: 1, 1, 128>}]} {
    %c0 = arith.constant 0 : index
    %c0_0 = arith.constant 0 : index
    %c0_1 = arith.constant 0 : index
    %0 = vector.load %arg2[%c0, %c0_0, %c0_1] : memref<1x4x128xf32, #tpu.memory_space<vmem>>, vector<1x4x128xf32>
    %c0_2 = arith.constant 0 : index
    %c0_3 = arith.constant 0 : index
    %c0_4 = arith.constant 0 : index
    %1 = vector.load %arg3[%c0_2, %c0_3, %c0_4] : memref<1x1x128xi32, #tpu.memory_space<vmem>>, vector<1x1x128xi32>
    %2 = tpu.iota {dimensions = array<i32: 2>} : vector<1x1x128xi32>
    %c128_i32 = arith.constant 128 : i32
    %3 = arith.muli %arg1, %c128_i32 : i32
    %4 = vector.broadcast %3 : i32 to vector<1x1x128xi32>
    %5 = arith.addi %4, %2 : vector<1x1x128xi32>
    %c256_i32 = arith.constant 256 : i32
    %6 = vector.broadcast %c256_i32 : i32 to vector<1x1x128xi32>
    %7 = arith.cmpi slt, %5, %6 : vector<1x1x128xi32>
    %c-1_i32 = arith.constant -1 : i32
    %8 = vector.broadcast %c-1_i32 : i32 to vector<1x1x128xi32>
    %9 = arith.cmpi ne, %1, %8 : vector<1x1x128xi32>
    %10 = arith.andi %9, %7 : vector<1x1x128xi1>
    %c0_i32 = arith.constant 0 : i32
    %11 = vector.broadcast %c0_i32 : i32 to vector<1x1x128xi32>
    %12 = arith.select %10, %1, %11 : vector<1x1x128xi1>, vector<1x1x128xi32>
    %cst = arith.constant dense<0xFF800000> : vector<1x128xf32>
    %13 = vector.multi_reduction <maximumf>, %0, %cst [1] : vector<1x4x128xf32> to vector<1x128xf32>
    %14 = vector.shape_cast %13 : vector<1x128xf32> to vector<1x1x128xf32>
    %15 = vector.broadcast %14 : vector<1x1x128xf32> to vector<1x4x128xf32>
    %16 = arith.subf %0, %15 : vector<1x4x128xf32>
    %17 = math.exp %16 : vector<1x4x128xf32>
    %cst_5 = arith.constant dense<0.000000e+00> : vector<1x128xf32>
    %18 = vector.multi_reduction <add>, %17, %cst_5 [1] : vector<1x4x128xf32> to vector<1x128xf32>
    %19 = vector.shape_cast %18 : vector<1x128xf32> to vector<1x1x128xf32>
    %20 = math.log %19 : vector<1x1x128xf32>
    %21 = arith.addf %20, %14 : vector<1x1x128xf32>
    %22 = tpu.iota {dimensions = array<i32: 1>} : vector<1x4x128xi32>
    %23 = vector.broadcast %12 : vector<1x1x128xi32> to vector<1x4x128xi32>
    %24 = arith.cmpi eq, %22, %23 : vector<1x4x128xi32>
    %cst_6 = arith.constant 0.000000e+00 : f32
    %25 = vector.broadcast %cst_6 : f32 to vector<1x4x128xf32>
    %26 = arith.select %24, %0, %25 : vector<1x4x128xi1>, vector<1x4x128xf32>
    %cst_7 = arith.constant dense<0.000000e+00> : vector<1x128xf32>
    %27 = vector.multi_reduction <add>, %26, %cst_7 [1] : vector<1x4x128xf32> to vector<1x128xf32>
    %28 = vector.shape_cast %27 : vector<1x128xf32> to vector<1x1x128xf32>
    %29 = arith.subf %21, %28 : vector<1x1x128xf32>
    %cst_8 = arith.constant 0.000000e+00 : f32
    %30 = vector.broadcast %cst_8 : f32 to vector<1x1x128xf32>
    %31 = arith.subf %30, %29 : vector<1x1x128xf32>
    %32 = math.exp %31 : vector<1x1x128xf32>
    %cst_9 = arith.constant 1.000000e+00 : f32
    %33 = vector.broadcast %cst_9 : f32 to vector<1x1x128xf32>
    %34 = arith.select %10, %32, %33 : vector<1x1x128xi1>, vector<1x1x128xf32>
    %c0_10 = arith.constant 0 : index
    %c0_11 = arith.constant 0 : index
    %c0_12 = arith.constant 0 : index
    %35 = vector.load %arg4[%c0_10, %c0_11, %c0_12] : memref<1x1x128xf32, #tpu.memory_space<vmem>>, vector<1x1x128xf32>
    tpu.vector_store %arg4[%c0_10, %c0_11, %c0_12], %34 {strides = array<i32>} : memref<1x1x128xf32, #tpu.memory_space<vmem>>, vector<1x1x128xf32>,
    %cst_13 = arith.constant 0.000000e+00 : f32
    %36 = vector.broadcast %cst_13 : f32 to vector<1x1x128xf32>
    %37 = arith.select %7, %29, %36 : vector<1x1x128xi1>, vector<1x1x128xf32>
    %c0_14 = arith.constant 0 : index
    %c0_15 = arith.constant 0 : index
    %c0_16 = arith.constant 0 : index
    %38 = vector.load %arg5[%c0_14, %c0_15, %c0_16] : memref<1x1x128xf32, #tpu.memory_space<vmem>>, vector<1x1x128xf32>
    tpu.vector_store %arg5[%c0_14, %c0_15, %c0_16], %37 {strides = array<i32>} : memref<1x1x128xf32, #tpu.memory_space<vmem>>, vector<1x1x128xf32>,
    return
  }
  func.func @transform_0(%arg0: i32, %arg1: i32) -> (i32, i32, i32) {
    %c0_i32 = arith.constant 0 : i32
    %c0_i32_0 = arith.constant 0 : i32
    return %arg0, %c0_i32, %arg1 : i32, i32, i32
  }
  func.func @transform_1(%arg0: i32, %arg1: i32) -> (i32, i32, i32) {
    %c0_i32 = arith.constant 0 : i32
    %c0_i32_0 = arith.constant 0 : i32
    return %arg0, %c0_i32, %arg1 : i32, i32, i32
  }
  func.func @transform_2(%arg0: i32, %arg1: i32) -> (i32, i32, i32) {
    %c0_i32 = arith.constant 0 : i32
    %c0_i32_0 = arith.constant 0 : i32
    return %arg0, %c0_i32, %arg1 : i32, i32, i32
  }
  func.func @transform_3(%arg0: i32, %arg1: i32) -> (i32, i32, i32) {
    %c0_i32 = arith.constant 0 : i32
    %c0_i32_0 = arith.constant 0 : i32
    return %arg0, %c0_i32, %arg1 : i32, i32, i32
  }
}

</mosaic_0001>

<llo_original>
// kernel: tpu_custom_call.1
$region0: #{tpu_custom_call.1}
  #allocation0 [shape = 'u32[]', space=smem, size = 0x4, offset = 0x4, fixed_abs, tag = 'smem constant byte address 0x4 - core index']
  #allocation1 [shape = 'u32[72,128]{1,0:T(1,128)}', space=vmem, size = 0x9000, scoped, tag = 'internal scratch']
  %s0 = inlined_call_operand.hbm [shape: f32[2,4,256], index: 0, kind: input, shape index: {}]
  %s1 = inlined_call_operand.hbm [shape: s32[2,1,256], index: 1, kind: input, shape index: {}]
  %s2 = inlined_call_operand.hbm [shape: f32[2,1,256], index: 2, kind: output, shape index: {0}]
  %s3 = inlined_call_operand.hbm [shape: f32[2,1,256], index: 3, kind: output, shape index: {1}]
  %4 = xla_tuple %s2, %s3
  %s5 = sld [smem:[#allocation0]]
  $region57: #{tpu_custom_call.1} parent=0
    _
  %s7 = ssub.s32 1, %s5
  %s8 = scalar_select 0, %s7, %s5
  $region1: #{tpu_custom_call.1} parent=0
    #allocation2 [shape = 'u8[4096]{0}', space=vmem, size = 0x1000, scoped, tag = 'input window, operand 0']
    #allocation3 [shape = 's32[2]{0}', space=sflag, size = 0x8, scoped, tag = 'scoped memory for tpu_custom_call.1']
    #allocation4 [shape = 's32[2]{0}', space=sflag, size = 0x8, scoped, tag = 'scoped memory for tpu_custom_call.1']
    #allocation5 [shape = 'u8[1024]{0}', space=vmem, size = 0x400, scoped, tag = 'input window, operand 1']
    #allocation6 [shape = 's32[2]{0}', space=sflag, size = 0x8, scoped, tag = 'scoped memory for tpu_custom_call.1']
    #allocation7 [shape = 'u8[1024]{0}', space=vmem, size = 0x400, scoped, tag = 'output window, operand 0']
    #allocation8 [shape = 'u8[1024]{0}', space=vmem, size = 0x400, scoped, tag = 'output window, operand 1']
    #allocation9 [shape = 's32[2]{0}', space=sflag, size = 0x8, scoped, tag = 'scoped memory for tpu_custom_call.1']
    %9 = vsyncpa [#allocation3], 0
    %s10 = scalar_lea.sflag [#allocation3], 1
    %11 = vsyncpa %s10, 0
    %12 = vsyncpa [#allocation6], 0
    %s13 = scalar_lea.sflag [#allocation6], 1
    %14 = vsyncpa %s13, 0
    %15 = vsyncpa [#allocation4], 0
    %s16 = scalar_lea.sflag [#allocation4], 1
    %17 = vsyncpa %s16, 0
    %18 = vsyncpa [#allocation9], 0
    %s19 = scalar_lea.sflag [#allocation9], 1
    %20 = vsyncpa %s19, 0
    loop: start=0, step=1, limit=6
    $region2: #{tpu_custom_call.1} parent=1 // loop_pre_header
      _
    $region3: #{tpu_custom_call.1} parent=1 // loop_header
      %s22 = sphi 0, %s26
      %p23 = scmp.ge.s32.totalorder %s22, 6
      %s29 = sphi 0, %s41
      %s30 = sphi 0, %s37
      %s31 = sphi 0, %s29
      %s32 = sphi 0, %s30
      %s33 = sphi 0, %s31
      %s34 = sphi 0, %s32
      %s46 = sphi 0, %s48
      %s49 = sphi 0, %s46
      %s50 = sphi 0, %s49
      %s66 = sphi 0, %s50
      %s74 = sphi 0, %s76
      %s77 = sphi 0, %s74
      %s78 = sphi 0, %s77
      %s94 = sphi 0, %s78
      %s102 = sphi 0, %s104
      %s105 = sphi 0, %s102
      %s106 = sphi 0, %s105
      %s122 = sphi 0, %s106
      %s130 = sphi 0, %s132
      %s133 = sphi 0, %s130
      %s134 = sphi 0, %s133
      %s150 = sphi 0, %s134
    $region4: #{tpu_custom_call.1} parent=1 // loop_header_branch
      %25 = sbr.rel (%p23) target = $region8
    $region5: #{tpu_custom_call.1} parent=1 // loop_body
      %s27 = ssub.s32 %s22, 1
      %s28 = ssub.s32 %s22, 2
      %s35 = sadd.s32 1, %s30
      %p36 = scmp.ge.s32.totalorder %s35, 2
      %s37 = scalar_select %p36, 0, %s35
      %s38 = sadd.s32 1, %s29
      %s39 = scalar_select %p36, %s38, %s29
      %p40 = scmp.ge.s32.totalorder %s39, 2
      %s41 = scalar_select %p40, 0, %s39
      %s42 = ssub.s32 %s29, %s41
      %s43 = ssub.s32 %s30, %s37
      %s44 = sor.u32 %s42, %s43
      %p45 = scmp.eq.s32.totalorder %s44, 0
      %s47 = sadd.s32 %s46, 1
      %s48 = scalar_select %p45, %s46, %s47
      %p51 = pneg %p45
      %p52 = scmp.eq.s32.totalorder %s22, 3
      %p53 = por %p51, %p52
      %p54 = scmp.ne.s32.totalorder %s46, %s49
      %p55 = scmp.eq.s32.totalorder %s22, 0
      %p56 = por %p54, %p55
      %p57 = scmp.ne.s32.totalorder %s46, %s49
      %p58 = scmp.eq.s32.totalorder %s27, 3
      %p59 = por %p57, %p58
      %p60 = scmp.ne.s32.totalorder %s49, %s50
      %p61 = scmp.eq.s32.totalorder %s27, 0
      %p62 = por %p60, %p61
      %p63 = scmp.ne.s32.totalorder %s49, %s50
      %p64 = scmp.eq.s32.totalorder %s28, 3
      %p65 = por %p63, %p64
      %p67 = scmp.ne.s32.totalorder %s50, %s66
      %p68 = scmp.eq.s32.totalorder %s28, 0
      %p69 = por %p67, %p68
      %s70 = ssub.s32 %s29, %s41
      %s71 = ssub.s32 %s30, %s37
      %s72 = sor.u32 %s70, %s71
      %p73 = scmp.eq.s32.totalorder %s72, 0
      %s75 = sadd.s32 %s74, 1
      %s76 = scalar_select %p73, %s74, %s75
      %p79 = pneg %p73
      %p80 = scmp.eq.s32.totalorder %s22, 3
      %p81 = por %p79, %p80
      %p82 = scmp.ne.s32.totalorder %s74, %s77
      %p83 = scmp.eq.s32.totalorder %s22, 0
      %p84 = por %p82, %p83
      %p85 = scmp.ne.s32.totalorder %s74, %s77
      %p86 = scmp.eq.s32.totalorder %s27, 3
      %p87 = por %p85, %p86
      %p88 = scmp.ne.s32.totalorder %s77, %s78
      %p89 = scmp.eq.s32.totalorder %s27, 0
      %p90 = por %p88, %p89
      %p91 = scmp.ne.s32.totalorder %s77, %s78
      %p92 = scmp.eq.s32.totalorder %s28, 3
      %p93 = por %p91, %p92
      %p95 = scmp.ne.s32.totalorder %s78, %s94
      %p96 = scmp.eq.s32.totalorder %s28, 0
      %p97 = por %p95, %p96
      %s98 = ssub.s32 %s29, %s41
      %s99 = ssub.s32 %s30, %s37
      %s100 = sor.u32 %s98, %s99
      %p101 = scmp.eq.s32.totalorder %s100, 0
      %s103 = sadd.s32 %s102, 1
      %s104 = scalar_select %p101, %s102, %s103
      %p107 = pneg %p101
      %p108 = scmp.eq.s32.totalorder %s22, 3
      %p109 = por %p107, %p108
      %p110 = scmp.ne.s32.totalorder %s102, %s105
      %p111 = scmp.eq.s32.totalorder %s22, 0
      %p112 = por %p110, %p111
      %p113 = scmp.ne.s32.totalorder %s102, %s105
      %p114 = scmp.eq.s32.totalorder %s27, 3
      %p115 = por %p113, %p114
      %p116 = scmp.ne.s32.totalorder %s105, %s106
      %p117 = scmp.eq.s32.totalorder %s27, 0
      %p118 = por %p116, %p117
      %p119 = scmp.ne.s32.totalorder %s105, %s106
      %p120 = scmp.eq.s32.totalorder %s28, 3
      %p121 = por %p119, %p120
      %p123 = scmp.ne.s32.totalorder %s106, %s122
      %p124 = scmp.eq.s32.totalorder %s28, 0
      %p125 = por %p123, %p124
      %s126 = ssub.s32 %s29, %s41
      %s127 = ssub.s32 %s30, %s37
      %s128 = sor.u32 %s126, %s127
      %p129 = scmp.eq.s32.totalorder %s128, 0
      %s131 = sadd.s32 %s130, 1
      %s132 = scalar_select %p129, %s130, %s131
      %p135 = pneg %p129
      %p136 = scmp.eq.s32.totalorder %s22, 3
      %p137 = por %p135, %p136
      %p138 = scmp.ne.s32.totalorder %s130, %s133
      %p139 = scmp.eq.s32.totalorder %s22, 0
      %p140 = por %p138, %p139
      %p141 = scmp.ne.s32.totalorder %s130, %s133
      %p142 = scmp.eq.s32.totalorder %s27, 3
      %p143 = por %p141, %p142
      %p144 = scmp.ne.s32.totalorder %s133, %s134
      %p145 = scmp.eq.s32.totalorder %s27, 0
      %p146 = por %p144, %p145
      %p147 = scmp.ne.s32.totalorder %s133, %s134
      %p148 = scmp.eq.s32.totalorder %s28, 3
      %p149 = por %p147, %p148
      %p151 = scmp.ne.s32.totalorder %s134, %s150
      %p152 = scmp.eq.s32.totalorder %s28, 0
      %p153 = por %p151, %p152
      %p154 = scmp.le.s32.totalorder 1, %s22
      %p155 = scmp.lt.s32.totalorder %s22, 5
      %p156 = pnand %p154, %p155
      %p157 = pneg %p156
      // Predicated region
      $region9: #{tpu_custom_call.1} parent=5 // pred_check
        _
      $region10: #{tpu_custom_call.1} parent=5 // pred_check_branch
        %159 = sbr.rel (%p156) target = $region12
      $region11: #{tpu_custom_call.1} parent=5 // pred_region
        %s160 = ssub.s32 %s22, 1
      $region12: #{tpu_custom_call.1} parent=5 // pred_fallthru
        _
      %p161 = scmp.lt.s32.totalorder %s22, 4
      // Predicated region
      $region13: #{tpu_custom_call.1} parent=5 // pred_check
        %p162 = pneg %p161
      $region14: #{tpu_custom_call.1} parent=5 // pred_check_branch
        %164 = sbr.rel (%p162) target = $region16
      $region15: #{tpu_custom_call.1} parent=5 // pred_region
        // Predicated region
        $region17: #{tpu_custom_call.1} parent=15 // pred_check
          %p165 = pneg %p56
        $region18: #{tpu_custom_call.1} parent=15 // pred_check_branch
          %167 = sbr.rel (%p165) target = $region20
        $region19: #{tpu_custom_call.1} parent=15 // pred_region
          %s168 = sand.u32 %s46, 1
          %s169 = scalar_lea.sflag [#allocation3], %s168
          %s170 = sand.u32 %s46, 1
          %s171 = smul.addr %s170, 4
          %s172 = scalar_lea.vmem [#allocation2], %s171
          %174 = vsyncadd %s169, 0
          %s175 = smul.addr %s29, 2
          %s176 = sadd.s32 %s30, %s175
          %s177 = smul.addr %s176, 4
          %s178 = scalar_lea.hbm %s0, %s177
          %s180 = sshll.u32 %s178, 4
          %s181 = int_to_ptr.hbm [resolvable:$true] %s180
          %s182 = sshll.u32 %s172, 4
          %s183 = int_to_ptr.vmem [resolvable:$true] %s182
          %185 = dma.hbm_to_vmem [thread:$0]  %s181, 64, %s183, %s169
        $region20: #{tpu_custom_call.1} parent=15 // pred_fallthru
          _
        // Predicated region
        $region21: #{tpu_custom_call.1} parent=15 // pred_check
          %p186 = pneg %p84
        $region22: #{tpu_custom_call.1} parent=15 // pred_check_branch
          %188 = sbr.rel (%p186) target = $region24
        $region23: #{tpu_custom_call.1} parent=15 // pred_region
          %s189 = sand.u32 %s74, 1
          %s190 = scalar_lea.sflag [#allocation6], %s189
          %s191 = sand.u32 %s74, 1
          %s192 = scalar_lea.vmem [#allocation5], %s191
          %194 = vsyncadd %s190, 0
          %s195 = smul.addr %s29, 2
          %s196 = sadd.s32 %s30, %s195
          %s197 = scalar_lea.hbm %s1, %s196
          %s199 = sshll.u32 %s197, 4
          %s200 = int_to_ptr.hbm [resolvable:$true] %s199
          %s201 = sshll.u32 %s192, 4
          %s202 = int_to_ptr.vmem [resolvable:$true] %s201
          %204 = dma.hbm_to_vmem [thread:$0]  %s200, 16, %s202, %s190
        $region24: #{tpu_custom_call.1} parent=15 // pred_fallthru
          _
      $region16: #{tpu_custom_call.1} parent=5 // pred_fallthru
        _
      %p205 = scmp.le.s32.totalorder 1, %s22
      %p206 = scmp.lt.s32.totalorder %s22, 5
      %p207 = pnand %p205, %p206
      %p208 = pneg %p207
      // Predicated region
      $region25: #{tpu_custom_call.1} parent=5 // pred_check
        _
      $region26: #{tpu_custom_call.1} parent=5 // pred_check_branch
        %210 = sbr.rel (%p207) target = $region28
      $region27: #{tpu_custom_call.1} parent=5 // pred_region
        %s211 = ssub.s32 %s22, 1
        %s212 = sand.u32 %s49, 1
        %s213 = scalar_lea.sflag [#allocation3], %s212
        %s214 = sand.u32 %s49, 1
        %s215 = smul.addr %s214, 4
        %s216 = scalar_lea.vmem [#allocation2], %s215
        // Predicated region
        $region29: #{tpu_custom_call.1} parent=27 // pred_check
          %p217 = pneg %p62
        $region30: #{tpu_custom_call.1} parent=27 // pred_check_branch
          %219 = sbr.rel (%p217) target = $region32
        $region31: #{tpu_custom_call.1} parent=27 // pred_region
          %221 = dma.done %s213, 64
        $region32: #{tpu_custom_call.1} parent=27 // pred_fallthru
          _
        %s222 = sand.u32 %s77, 1
        %s223 = scalar_lea.sflag [#allocation6], %s222
        %s224 = sand.u32 %s77, 1
        %s225 = scalar_lea.vmem [#allocation5], %s224
        // Predicated region
        $region33: #{tpu_custom_call.1} parent=27 // pred_check
          %p226 = pneg %p90
        $region34: #{tpu_custom_call.1} parent=27 // pred_check_branch
          %228 = sbr.rel (%p226) target = $region36
        $region35: #{tpu_custom_call.1} parent=27 // pred_region
          %230 = dma.done %s223, 16
        $region36: #{tpu_custom_call.1} parent=27 // pred_fallthru
          _
        %s231 = sand.u32 %s49, 1
        %s232 = scalar_lea.sflag [#allocation3], %s231
        %s233 = sand.u32 %s49, 1
        %s234 = smul.addr %s233, 4
        %s235 = scalar_lea.vmem [#allocation2], %s234
        %p236 = pneg %p62
        %p237 = pneg %p59
        %s238 = sand.u32 %s77, 1
        %s239 = scalar_lea.sflag [#allocation6], %s238
        %s240 = sand.u32 %s77, 1
        %s241 = scalar_lea.vmem [#allocation5], %s240
        %p242 = pneg %p90
        %p243 = pneg %p87
        %p244 = pneg %p118
        %p245 = pneg %p115
        %s246 = sand.u32 %s105, 1
        %s247 = scalar_lea.sflag [#allocation4], %s246
        %s248 = sand.u32 %s105, 1
        %s249 = scalar_lea.vmem [#allocation7], %s248
        %p250 = pneg %p146
        %p251 = pneg %p143
        %s252 = sand.u32 %s133, 1
        %s253 = scalar_lea.sflag [#allocation9], %s252
        %s254 = sand.u32 %s133, 1
        %s255 = scalar_lea.vmem [#allocation8], %s254
        %v256 = vld [vmem:[%s216] sm:$0xf]
        %v257 = vld [vmem:[%s225] sm:$0x1]
        %v258 = vlaneseq
        %v259 = vand.u32 %v258, 127
        %s260 = smul.u32 %s32, 128
        %v261 = vstv %s260
        %v262 = vadd.s32 %v261, %v259
        %vm263 = vcmp.lt.s32.totalorder %v262, 256
        %vm264 = vcmp.ne.s32.totalorder %v257, 4294967295
        %vm265 = vmand %vm264, %vm263
        %v266 = vsel %vm265, %v257, 0
        %vm267 = vcmask 1043456
        %v268 = vsel %vm267, %v256, -inf
        %v269 = vrot.slane %v268, 4
        %v270 = vmax.f32 %v268, %v269
        %v271 = vrot.slane %v270, 2
        %v272 = vmax.f32 %v270, %v271
        %v273 = vrot.slane %v272, 1
        %v274 = vmax.f32 %v272, %v273
        %v275 = vsub.f32 %v256, %v274
        %v276 = vmul.f32 %v275, 1.442695
        %v277 = vpow.pop %v276
        %v278 = vsel %vm267, %v277, 0.0
        %v279 = vrot.slane %v278, 4
        %v280 = vadd.f32 %v278, %v279
        %v281 = vrot.slane %v280, 2
        %v282 = vadd.f32 %v280, %v281
        %v283 = vrot.slane %v282, 1
        %v284 = vadd.f32 %v282, %v283
        %v285 = vlog2.pop %v284
        %v286 = vmul.f32 %v285, 0.6931472
        %v287 = vadd.f32 %v286, %v274
        %v288 = vlaneseq
        %v289 = vshrl.u32 %v288, 7
        %v290 = vperm.slane %v266, 0
        %vm291 = vcmp.eq.s32.totalorder %v289, %v290
        %v292 = vsel %vm291, %v256, 0.0
        %v293 = vsel %vm267, %v292, 0.0
        %v294 = vrot.slane %v293, 4
        %v295 = vadd.f32 %v293, %v294
        %v296 = vrot.slane %v295, 2
        %v297 = vadd.f32 %v295, %v296
        %v298 = vrot.slane %v297, 1
        %v299 = vadd.f32 %v297, %v298
        %v300 = vsub.f32 %v287, %v299
        %v301 = vsub.f32 0.0, %v300
        %v302 = vmul.f32 %v301, 1.442695
        %v303 = vpow.pop %v302
        %v304 = vsel %vm265, %v303, 1.0
        %305 = vst [vmem:[%s249] sm:$0x1] %v304
        %v306 = vsel %vm263, %v300, 0.0
        %307 = vst [vmem:[%s255] sm:$0x1] %v306
        %s308 = sand.u32 %s105, 1
        %s309 = scalar_lea.sflag [#allocation4], %s308
        %s310 = sand.u32 %s105, 1
        %s311 = scalar_lea.vmem [#allocation7], %s310
        %s312 = sand.u32 %s133, 1
        %s313 = scalar_lea.sflag [#allocation9], %s312
        %s314 = sand.u32 %s133, 1
        %s315 = scalar_lea.vmem [#allocation8], %s314
        // Predicated region
        $region37: #{tpu_custom_call.1} parent=27 // pred_check
          %p316 = pneg %p115
        $region38: #{tpu_custom_call.1} parent=27 // pred_check_branch
          %318 = sbr.rel (%p316) target = $region40
        $region39: #{tpu_custom_call.1} parent=27 // pred_region
          %320 = vsyncadd %s309, 0
          %s321 = smul.addr %s31, 2
          %s322 = sadd.s32 %s32, %s321
          %s323 = scalar_lea.hbm %s2, %s322
          %s325 = sshll.u32 %s311, 4
          %s326 = int_to_ptr.vmem [resolvable:$true] %s325
          %s327 = sshll.u32 %s323, 4
          %s328 = int_to_ptr.hbm [resolvable:$true] %s327
          %330 = dma.vmem_to_hbm [thread:$0]  %s326, 16, %s328, %s309
        $region40: #{tpu_custom_call.1} parent=27 // pred_fallthru
          _
        // Predicated region
        $region41: #{tpu_custom_call.1} parent=27 // pred_check
          %p331 = pneg %p143
        $region42: #{tpu_custom_call.1} parent=27 // pred_check_branch
          %333 = sbr.rel (%p331) target = $region44
        $region43: #{tpu_custom_call.1} parent=27 // pred_region
          %335 = vsyncadd %s313, 0
          %s336 = smul.addr %s31, 2
          %s337 = sadd.s32 %s32, %s336
          %s338 = scalar_lea.hbm %s3, %s337
          %s340 = sshll.u32 %s315, 4
          %s341 = int_to_ptr.vmem [resolvable:$true] %s340
          %s342 = sshll.u32 %s338, 4
          %s343 = int_to_ptr.hbm [resolvable:$true] %s342
          %345 = dma.vmem_to_hbm [thread:$0]  %s341, 16, %s343, %s313
        $region44: #{tpu_custom_call.1} parent=27 // pred_fallthru
          _
      $region28: #{tpu_custom_call.1} parent=5 // pred_fallthru
        _
      %p346 = scmp.le.s32.totalorder 2, %s22
      // Predicated region
      $region45: #{tpu_custom_call.1} parent=5 // pred_check
        %p347 = pneg %p346
      $region46: #{tpu_custom_call.1} parent=5 // pred_check_branch
        %349 = sbr.rel (%p347) target = $region48
      $region47: #{tpu_custom_call.1} parent=5 // pred_region
        %s350 = ssub.s32 %s22, 2
        // Predicated region
        $region49: #{tpu_custom_call.1} parent=47 // pred_check
          %p351 = pneg %p121
        $region50: #{tpu_custom_call.1} parent=47 // pred_check_branch
          %353 = sbr.rel (%p351) target = $region52
        $region51: #{tpu_custom_call.1} parent=47 // pred_region
          %s354 = sand.u32 %s106, 1
          %s355 = scalar_lea.sflag [#allocation4], %s354
          %s356 = sand.u32 %s106, 1
          %s357 = scalar_lea.vmem [#allocation7], %s356
          %359 = dma.done %s355, 16
        $region52: #{tpu_custom_call.1} parent=47 // pred_fallthru
          _
        // Predicated region
        $region53: #{tpu_custom_call.1} parent=47 // pred_check
          %p360 = pneg %p149
        $region54: #{tpu_custom_call.1} parent=47 // pred_check_branch
          %362 = sbr.rel (%p360) target = $region56
        $region55: #{tpu_custom_call.1} parent=47 // pred_region
          %s363 = sand.u32 %s134, 1
          %s364 = scalar_lea.sflag [#allocation9], %s363
          %s365 = sand.u32 %s134, 1
          %s366 = scalar_lea.vmem [#allocation8], %s365
          %368 = dma.done %s364, 16
        $region56: #{tpu_custom_call.1} parent=47 // pred_fallthru
          _
      $region48: #{tpu_custom_call.1} parent=5 // pred_fallthru
        _
    $region6: #{tpu_custom_call.1} parent=1 // loop_footer
      %s26 = sadd.s32 1, %s22
    $region7: #{tpu_custom_call.1} parent=1 // loop_footer_branch
      %21 = sbr.rel target = $region3
    $region8: #{tpu_custom_call.1} parent=1 // loop_exit
      _
    %369 = vsyncpa [#allocation3], 1
    %s370 = scalar_lea.sflag [#allocation3], 1
    %371 = vsyncpa %s370, 1
    %372 = vsyncpa [#allocation6], 1
    %s373 = scalar_lea.sflag [#allocation6], 1
    %374 = vsyncpa %s373, 1
    %375 = vsyncpa [#allocation4], 1
    %s376 = scalar_lea.sflag [#allocation4], 1
    %377 = vsyncpa %s376, 1
    %378 = vsyncpa [#allocation9], 1
    %s379 = scalar_lea.sflag [#allocation9], 1
    %380 = vsyncpa %s379, 1

</llo_original>
